<compile_context>
chip_gen: v7x
topology: tpu7x:2x2x1
jax: 0.10.0
libtpu: 0.0.40
codegen_flags: <defaults>
</compile_context>

<pallas_src>
import functools

import jax
import jax.numpy as jnp
from jax import lax
from jax.experimental import pallas as pl
from jax.experimental.pallas import tpu as pltpu


def _aux_dice_sums_kernel(pred_ref, aux_ref, labels_ref, out_ref):
    """Streaming pass over pixel tiles for one (split, batch) slice.

    pred_ref / aux_ref : (C, tm) logits tile (f32 or bf16)
    labels_ref         : (1, tm) int32 labels, -1 marks padded / invalid pixels
    out_ref            : (C, 5)  f32, columns = [inter_pred, pred_sum,
                                                 inter_aux,  aux_sum, target_count]
    """
    t = pl.program_id(2)

    @pl.when(t == 0)
    def _():
        out_ref[...] = jnp.zeros_like(out_ref)

    labels = labels_ref[...]                                   # (1, tm) int32
    valid_b = labels >= 0                                      # (1, tm) bool
    valid_f = valid_b.astype(jnp.float32)

    class_ids = lax.broadcasted_iota(jnp.int32, pred_ref.shape, 0)   # (C, tm)
    onehot = (labels == class_ids).astype(jnp.float32)               # (C, tm)

    def masked_softmax(ref):
        x = ref[...].astype(jnp.float32)                       # (C, tm)
        # Neutralize garbage from a partial/duplicated tail block BEFORE exp:
        # inf/NaN there would otherwise poison the lane reductions via inf * 0.
        x = jnp.where(valid_b, x, 0.0)
        m = jnp.max(x, axis=0, keepdims=True)                  # (1, tm)
        e = jnp.exp(x - m)
        denom = jnp.sum(e, axis=0, keepdims=True)              # (1, tm)
        inv = pl.reciprocal(denom, approx=True) * valid_f      # EUP reciprocal + pad mask
        return e * inv                                         # (C, tm)

    sm_pred = masked_softmax(pred_ref)
    sm_aux = masked_softmax(aux_ref)

    # Immediate per-tile lane reductions -> tiny (C, 1) pieces (no full-width RMW scratch).
    inter_p = jnp.sum(sm_pred * onehot, axis=1, keepdims=True)
    sum_p = jnp.sum(sm_pred, axis=1, keepdims=True)
    inter_a = jnp.sum(sm_aux * onehot, axis=1, keepdims=True)
    sum_a = jnp.sum(sm_aux, axis=1, keepdims=True)
    count = jnp.sum(onehot, axis=1, keepdims=True)

    upd = jnp.concatenate([inter_p, sum_p, inter_a, sum_a, count], axis=1)   # (C, 5)
    out_ref[...] += upd


def _aux_dice_class_sums(y_pred, y_aux, y_true, *, tm=None):
    """Returns (C, 5) f32: [inter_pred, pred_sum, inter_aux, aux_sum, count] per class,
    summed over batch and pixels (== the torch dims=(0, 2) reduction after one-hot)."""
    B, C, H, W = y_pred.shape
    HW = H * W

    pred = y_pred.reshape(B, C, HW)              # free reshape of NCHW (no transpose pass)
    aux = y_aux.reshape(B, C, HW)
    labels = y_true.reshape(B, 1, HW).astype(jnp.int32)

    itemsize = jnp.dtype(y_pred.dtype).itemsize

    # Tile size: lane-dense, big enough to amortize per-step overhead, sized from C/dtype.
    if tm is None:
        target_bytes = 8 * 1024 * 1024                     # combined pred+aux per step
        tm = target_bytes // max(1, 2 * C * itemsize)
        tm = max(1024, min(tm, 32768))
    tm = max(128, (int(tm) // 128) * 128)
    tm = min(tm, pl.cdiv(HW, 128) * 128)                   # don't over-size tiny inputs

    T = pl.cdiv(HW, tm)                                    # pixel tiles actually needed
    SPLIT = 2 if T >= 2 else 1                             # keep both v7x TCs busy at B=1
    T_half = pl.cdiv(T, SPLIT)

    # Pad ONLY the labels (cheap) so every label block is in-bounds; -1 == invalid pixel.
    HW_lab = SPLIT * T_half * tm
    pad = HW_lab - HW
    if pad:
        labels = jnp.pad(labels, ((0, 0), (0, 0), (0, pad)), constant_values=-1)

    # Logits blocks may go past HW (partial last tile / duplicate tile when T is odd):
    # clamp the block index; the -1 labels zero out any duplicated/garbage contribution.
    def logits_idx(p, b, t):
        return (b, 0, jnp.minimum(p * T_half + t, T - 1))

    def labels_idx(p, b, t):
        return (b, 0, p * T_half + t)

    # VMEM budget: double-buffered input tiles + labels + tiny output block.
    vmem_needed = (2 * 2 * C * tm * itemsize       # pred + aux tiles, double-buffered
                   + 2 * tm * 4                    # labels tile (int32), double-buffered
                   + 2 * C * 5 * 4)                # (C, 5) output block
    vmem_limit = int(min(max(2 * vmem_needed, 16 * 1024 * 1024), 48 * 1024 * 1024))

    sums = pl.pallas_call(
        _aux_dice_sums_kernel,
        out_shape=jax.ShapeDtypeStruct((SPLIT, B, C, 5), jnp.float32),
        grid_spec=pltpu.PrefetchScalarGridSpec(
            num_scalar_prefetch=0,
            grid=(SPLIT, B, T_half),
            in_specs=[
                pl.BlockSpec((None, C, tm), logits_idx),      # main logits
                pl.BlockSpec((None, C, tm), logits_idx),      # aux logits
                pl.BlockSpec((None, 1, tm), labels_idx),      # labels (padded with -1)
            ],
            out_specs=pl.BlockSpec((None, None, C, 5), lambda p, b, t: (p, b, 0, 0)),
        ),
        compiler_params=pltpu.CompilerParams(
            dimension_semantics=("parallel", "parallel", "arbitrary"),
            vmem_limit_bytes=vmem_limit,
        ),
    )(pred, aux, labels)

    return jnp.sum(sums, axis=(0, 1))              # (C, 5) totals over split/batch


def _dice_from_sums(inter, pred_sum, count, smooth=0.0, eps=1e-7):
    cardinality = pred_sum + count
    score = (2.0 * inter + smooth) / jnp.maximum(cardinality + smooth, eps)
    loss = (1.0 - score) * (count > 0).astype(jnp.float32)   # mask classes absent in y_true
    return jnp.mean(loss)                                    # classes=None -> mean over classes


@functools.partial(jax.jit, static_argnames=("delta", "gamma", "tm"))
def aux_dice_loss(y_aux, y_pred, y_true, *, delta, gamma, tm=None):
    """AuxDiceLoss.forward((y_aux, y_pred), y_true). Logits may be f32 or bf16."""
    sums = _aux_dice_class_sums(y_pred, y_aux, y_true, tm=tm)
    main_loss = _dice_from_sums(sums[:, 0], sums[:, 1], sums[:, 4])
    aux_loss = _dice_from_sums(sums[:, 2], sums[:, 3], sums[:, 4])
    return delta * main_loss + gamma * aux_loss


# ------------------------- pure-JAX reference (for verification) -------------------------
def _dice_reference(logits, labels_flat, C):
    p = jax.nn.softmax(logits.astype(jnp.float32), axis=1)
    B = p.shape[0]
    p = p.reshape(B, C, -1)
    t = jnp.transpose(jax.nn.one_hot(labels_flat, C, dtype=jnp.float32), (0, 2, 1))
    inter = jnp.sum(p * t, axis=(0, 2))
    card = jnp.sum(p + t, axis=(0, 2))
    score = 2.0 * inter / jnp.maximum(card, 1e-7)
    loss = (1.0 - score) * (jnp.sum(t, axis=(0, 2)) > 0)
    return jnp.mean(loss)


def aux_dice_loss_reference(y_aux, y_pred, y_true, *, delta, gamma):
    B, C = y_pred.shape[:2]
    lab = y_true.reshape(B, -1)
    return delta * _dice_reference(y_pred, lab, C) + gamma * _dice_reference(y_aux, lab, C)


if __name__ == "__main__":
    DELTA = 1.0     # AuxDiceLoss.__init__ args
    GAMMA = 0.4

    key = jax.random.PRNGKey(0)
    k1, k2, k3, k4, k5, k6 = jax.random.split(key, 6)

    # Case 1: small shapes implied by the module (single tile per batch element).
    B, C, H, W = 2, 4, 16, 16
    y_pred = jax.random.normal(k1, (B, C, H, W), dtype=jnp.float32)
    y_aux = jax.random.normal(k2, (B, C, H, W), dtype=jnp.float32)
    y_true = jax.random.randint(k3, (B, H, W), 0, C, dtype=jnp.int32)

    loss = aux_dice_loss(y_aux, y_pred, y_true, delta=DELTA, gamma=GAMMA)
    ref = aux_dice_loss_reference(y_aux, y_pred, y_true, delta=DELTA, gamma=GAMMA)
    jax.block_until_ready((loss, ref))
    assert bool(jnp.isfinite(loss)), "loss is not finite"
    assert abs(float(loss) - float(ref)) < 2e-3, (float(loss), float(ref))

    # Case 2: B=1 with a ragged tile count -> exercises the dual-core pixel split,
    # the clamped duplicate tile and the in-kernel tail masking (no logits padding).
    B2, C2, H2, W2 = 1, 4, 48, 48
    y_pred2 = jax.random.normal(k4, (B2, C2, H2, W2), dtype=jnp.float32)
    y_aux2 = jax.random.normal(k5, (B2, C2, H2, W2), dtype=jnp.float32)
    y_true2 = jax.random.randint(k6, (B2, H2, W2), 0, C2, dtype=jnp.int32)

    loss2 = aux_dice_loss(y_aux2, y_pred2, y_true2, delta=DELTA, gamma=GAMMA, tm=1024)
    ref2 = aux_dice_loss_reference(y_aux2, y_pred2, y_true2, delta=DELTA, gamma=GAMMA)
    jax.block_until_ready((loss2, ref2))
    assert bool(jnp.isfinite(loss2)), "loss is not finite"
    assert abs(float(loss2) - float(ref2)) < 2e-3, (float(loss2), float(ref2))

    print("KERNEL_OK")
</pallas_src>

<mosaic_0001>
module attributes {stable_mosaic.version = 11 : i64} {
  func.func @_aux_dice_sums_kernel(%arg0: i32, %arg1: i32, %arg2: i32, %arg3: memref<1x4x256xf32, #tpu.memory_space<vmem>>, %arg4: memref<1x4x256xf32, #tpu.memory_space<vmem>>, %arg5: memref<1x1x256xi32, #tpu.memory_space<vmem>>, %arg6: memref<1x1x4x5xf32, #tpu.memory_space<vmem>>) attributes {dimension_semantics = [#tpu.dimension_semantics<parallel>, #tpu.dimension_semantics<parallel>, #tpu.dimension_semantics<arbitrary>], iteration_bounds = array<i64: 1, 2, 1>, scalar_prefetch = 0 : i64, scratch_operands = 0 : i64, tpu.core_type = #tpu.core_type<tc>, window_params = [{transform_indices = @transform_0, window_bounds = array<i64: 1, 4, 256>}, {transform_indices = @transform_1, window_bounds = array<i64: 1, 4, 256>}, {transform_indices = @transform_2, window_bounds = array<i64: 1, 1, 256>}, {transform_indices = @transform_3, window_bounds = array<i64: 1, 1, 4, 5>}]} {
    %c0_i32 = arith.constant 0 : i32
    %0 = arith.cmpi eq, %arg2, %c0_i32 : i32
    %1 = arith.extui %0 : i1 to i32
    %c0_i32_0 = arith.constant 0 : i32
    %2 = arith.cmpi ne, %1, %c0_i32_0 : i32
    scf.if %2 {
      %cst_28 = arith.constant 0.000000e+00 : f32
      %67 = vector.broadcast %cst_28 : f32 to vector<4x5xf32>
      %c0_29 = arith.constant 0 : index
      %c0_30 = arith.constant 0 : index
      %c0_31 = arith.constant 0 : index
      %c0_32 = arith.constant 0 : index
      %68 = vector.load %arg6[%c0_29, %c0_30, %c0_31, %c0_32] : memref<1x1x4x5xf32, #tpu.memory_space<vmem>>, vector<1x1x4x5xf32>
      %69 = vector.shape_cast %68 : vector<1x1x4x5xf32> to vector<4x5xf32>
      %70 = vector.shape_cast %67 : vector<4x5xf32> to vector<1x1x4x5xf32>
      tpu.vector_store %arg6[%c0_29, %c0_30, %c0_31, %c0_32], %70 {strides = array<i32>} : memref<1x1x4x5xf32, #tpu.memory_space<vmem>>, vector<1x1x4x5xf32>,
    } else {
    }
    %c0 = arith.constant 0 : index
    %c0_1 = arith.constant 0 : index
    %c0_2 = arith.constant 0 : index
    %3 = vector.load %arg5[%c0, %c0_1, %c0_2] : memref<1x1x256xi32, #tpu.memory_space<vmem>>, vector<1x1x256xi32>
    %4 = vector.shape_cast %3 : vector<1x1x256xi32> to vector<1x256xi32>
    %c0_i32_3 = arith.constant 0 : i32
    %5 = vector.broadcast %c0_i32_3 : i32 to vector<1x256xi32>
    %6 = arith.cmpi sge, %4, %5 : vector<1x256xi32>
    %7 = arith.extui %6 : vector<1x256xi1> to vector<1x256xi32>
    %8 = arith.sitofp %7 : vector<1x256xi32> to vector<1x256xf32>
    %9 = tpu.iota {dimensions = array<i32: 0>} : vector<4x256xi32>
    %10 = vector.broadcast %4 : vector<1x256xi32> to vector<4x256xi32>
    %11 = arith.cmpi eq, %10, %9 : vector<4x256xi32>
    %12 = arith.extui %11 : vector<4x256xi1> to vector<4x256xi32>
    %13 = arith.sitofp %12 : vector<4x256xi32> to vector<4x256xf32>
    %c0_4 = arith.constant 0 : index
    %c0_5 = arith.constant 0 : index
    %c0_6 = arith.constant 0 : index
    %14 = vector.load %arg3[%c0_4, %c0_5, %c0_6] : memref<1x4x256xf32, #tpu.memory_space<vmem>>, vector<1x4x256xf32>
    %15 = vector.shape_cast %14 : vector<1x4x256xf32> to vector<4x256xf32>
    %cst = arith.constant 0.000000e+00 : f32
    %16 = vector.shape_cast %6 : vector<1x256xi1> to vector<1x256xi1>
    %17 = vector.broadcast %16 : vector<1x256xi1> to vector<4x256xi1>
    %18 = vector.broadcast %cst : f32 to vector<4x256xf32>
    %19 = arith.select %17, %15, %18 : vector<4x256xi1>, vector<4x256xf32>
    %cst_7 = arith.constant dense<0xFF800000> : vector<256xf32>
    %20 = vector.multi_reduction <maximumf>, %19, %cst_7 [0] : vector<4x256xf32> to vector<256xf32>
    %21 = vector.shape_cast %20 : vector<256xf32> to vector<1x256xf32>
    %22 = vector.broadcast %21 : vector<1x256xf32> to vector<4x256xf32>
    %23 = arith.subf %19, %22 : vector<4x256xf32>
    %24 = math.exp %23 : vector<4x256xf32>
    %cst_8 = arith.constant dense<0.000000e+00> : vector<256xf32>
    %25 = vector.multi_reduction <add>, %24, %cst_8 [0] : vector<4x256xf32> to vector<256xf32>
    %26 = vector.shape_cast %25 : vector<256xf32> to vector<1x256xf32>
    %27 = tpu.reciprocal %26 {approx = true} : vector<1x256xf32> -> vector<1x256xf32>
    %28 = arith.mulf %27, %8 : vector<1x256xf32>
    %29 = vector.broadcast %28 : vector<1x256xf32> to vector<4x256xf32>
    %30 = arith.mulf %24, %29 : vector<4x256xf32>
    %c0_9 = arith.constant 0 : index
    %c0_10 = arith.constant 0 : index
    %c0_11 = arith.constant 0 : index
    %31 = vector.load %arg4[%c0_9, %c0_10, %c0_11] : memref<1x4x256xf32, #tpu.memory_space<vmem>>, vector<1x4x256xf32>
    %32 = vector.shape_cast %31 : vector<1x4x256xf32> to vector<4x256xf32>
    %cst_12 = arith.constant 0.000000e+00 : f32
    %33 = vector.shape_cast %6 : vector<1x256xi1> to vector<1x256xi1>
    %34 = vector.broadcast %33 : vector<1x256xi1> to vector<4x256xi1>
    %35 = vector.broadcast %cst_12 : f32 to vector<4x256xf32>
    %36 = arith.select %34, %32, %35 : vector<4x256xi1>, vector<4x256xf32>
    %cst_13 = arith.constant dense<0xFF800000> : vector<256xf32>
    %37 = vector.multi_reduction <maximumf>, %36, %cst_13 [0] : vector<4x256xf32> to vector<256xf32>
    %38 = vector.shape_cast %37 : vector<256xf32> to vector<1x256xf32>
    %39 = vector.broadcast %38 : vector<1x256xf32> to vector<4x256xf32>
    %40 = arith.subf %36, %39 : vector<4x256xf32>
    %41 = math.exp %40 : vector<4x256xf32>
    %cst_14 = arith.constant dense<0.000000e+00> : vector<256xf32>
    %42 = vector.multi_reduction <add>, %41, %cst_14 [0] : vector<4x256xf32> to vector<256xf32>
    %43 = vector.shape_cast %42 : vector<256xf32> to vector<1x256xf32>
    %44 = tpu.reciprocal %43 {approx = true} : vector<1x256xf32> -> vector<1x256xf32>
    %45 = arith.mulf %44, %8 : vector<1x256xf32>
    %46 = vector.broadcast %45 : vector<1x256xf32> to vector<4x256xf32>
    %47 = arith.mulf %41, %46 : vector<4x256xf32>
    %48 = arith.mulf %30, %13 : vector<4x256xf32>
    %cst_15 = arith.constant dense<0.000000e+00> : vector<4xf32>
    %49 = vector.multi_reduction <add>, %48, %cst_15 [1] : vector<4x256xf32> to vector<4xf32>
    %50 = vector.shape_cast %49 : vector<4xf32> to vector<4x1xf32>
    %cst_16 = arith.constant dense<0.000000e+00> : vector<4xf32>
    %51 = vector.multi_reduction <add>, %30, %cst_16 [1] : vector<4x256xf32> to vector<4xf32>
    %52 = vector.shape_cast %51 : vector<4xf32> to vector<4x1xf32>
    %53 = arith.mulf %47, %13 : vector<4x256xf32>
    %cst_17 = arith.constant dense<0.000000e+00> : vector<4xf32>
    %54 = vector.multi_reduction <add>, %53, %cst_17 [1] : vector<4x256xf32> to vector<4xf32>
    %55 = vector.shape_cast %54 : vector<4xf32> to vector<4x1xf32>
    %cst_18 = arith.constant dense<0.000000e+00> : vector<4xf32>
    %56 = vector.multi_reduction <add>, %47, %cst_18 [1] : vector<4x256xf32> to vector<4xf32>
    %57 = vector.shape_cast %56 : vector<4xf32> to vector<4x1xf32>
    %cst_19 = arith.constant dense<0.000000e+00> : vector<4xf32>
    %58 = vector.multi_reduction <add>, %13, %cst_19 [1] : vector<4x256xf32> to vector<4xf32>
    %59 = vector.shape_cast %58 : vector<4xf32> to vector<4x1xf32>
    %60 = tpu.concatenate %50, %52, %55, %57, %59 in 1 : vector<4x1xf32>, vector<4x1xf32>, vector<4x1xf32>, vector<4x1xf32>, vector<4x1xf32> -> vector<4x5xf32>
    %c0_20 = arith.constant 0 : index
    %c0_21 = arith.constant 0 : index
    %c0_22 = arith.constant 0 : index
    %c0_23 = arith.constant 0 : index
    %61 = vector.load %arg6[%c0_20, %c0_21, %c0_22, %c0_23] : memref<1x1x4x5xf32, #tpu.memory_space<vmem>>, vector<1x1x4x5xf32>
    %62 = vector.shape_cast %61 : vector<1x1x4x5xf32> to vector<4x5xf32>
    %63 = arith.addf %62, %60 : vector<4x5xf32>
    %c0_24 = arith.constant 0 : index
    %c0_25 = arith.constant 0 : index
    %c0_26 = arith.constant 0 : index
    %c0_27 = arith.constant 0 : index
    %64 = vector.load %arg6[%c0_24, %c0_25, %c0_26, %c0_27] : memref<1x1x4x5xf32, #tpu.memory_space<vmem>>, vector<1x1x4x5xf32>
    %65 = vector.shape_cast %64 : vector<1x1x4x5xf32> to vector<4x5xf32>
    %66 = vector.shape_cast %63 : vector<4x5xf32> to vector<1x1x4x5xf32>
    tpu.vector_store %arg6[%c0_24, %c0_25, %c0_26, %c0_27], %66 {strides = array<i32>} : memref<1x1x4x5xf32, #tpu.memory_space<vmem>>, vector<1x1x4x5xf32>,
    return
  }
  func.func @transform_0(%arg0: i32, %arg1: i32, %arg2: i32) -> (i32, i32, i32) {
    %c1_i32 = arith.constant 1 : i32
    %0 = arith.muli %arg0, %c1_i32 : i32
    %1 = arith.addi %0, %arg2 : i32
    %c0_i32 = arith.constant 0 : i32
    %2 = arith.minsi %1, %c0_i32 : i32
    %c0_i32_0 = arith.constant 0 : i32
    %c0_i32_1 = arith.constant 0 : i32
    return %arg1, %c0_i32_0, %2 : i32, i32, i32
  }
  func.func @transform_1(%arg0: i32, %arg1: i32, %arg2: i32) -> (i32, i32, i32) {
    %c1_i32 = arith.constant 1 : i32
    %0 = arith.muli %arg0, %c1_i32 : i32
    %1 = arith.addi %0, %arg2 : i32
    %c0_i32 = arith.constant 0 : i32
    %2 = arith.minsi %1, %c0_i32 : i32
    %c0_i32_0 = arith.constant 0 : i32
    %c0_i32_1 = arith.constant 0 : i32
    return %arg1, %c0_i32_0, %2 : i32, i32, i32
  }
  func.func @transform_2(%arg0: i32, %arg1: i32, %arg2: i32) -> (i32, i32, i32) {
    %c1_i32 = arith.constant 1 : i32
    %0 = arith.muli %arg0, %c1_i32 : i32
    %1 = arith.addi %0, %arg2 : i32
    %c0_i32 = arith.constant 0 : i32
    %c0_i32_0 = arith.constant 0 : i32
    return %arg1, %c0_i32, %1 : i32, i32, i32
  }
  func.func @transform_3(%arg0: i32, %arg1: i32, %arg2: i32) -> (i32, i32, i32, i32) {
    %c0_i32 = arith.constant 0 : i32
    %c0_i32_0 = arith.constant 0 : i32
    %c0_i32_1 = arith.constant 0 : i32
    return %arg0, %arg1, %c0_i32, %c0_i32_0 : i32, i32, i32, i32
  }
}

</mosaic_0001>

<llo_original>
// kernel: aux_dice_loss.1
$region0: #{aux_dice_loss.1}
  #allocation0 [shape = 'u32[]', space=smem, size = 0x4, offset = 0x4, fixed_abs, tag = 'smem constant byte address 0x4 - core index']
  #allocation1 [shape = 'u32[144,128]{1,0:T(1,128)}', space=vmem, size = 0x12000, scoped, tag = 'internal scratch']
  %s0 = inlined_call_operand.vmem [shape: f32[2,4,256], index: 0, kind: input, shape index: {}]
  %s1 = inlined_call_operand.vmem [shape: f32[2,4,256], index: 1, kind: input, shape index: {}]
  %s2 = inlined_call_operand.vmem [shape: s32[2,1,256], index: 2, kind: input, shape index: {}]
  %s3 = inlined_call_operand.vmem [shape: f32[1,2,4,5], index: 3, kind: output, shape index: {}]
  %s4 = sld [smem:[#allocation0]]
  $region49: #{aux_dice_loss.1} parent=0
    _
  %s6 = ssub.s32 1, %s4
  %s7 = scalar_select 0, %s6, %s4
  loop: start=0, step=1, limit=4
  $region2: #{aux_dice_loss.1} parent=0 // loop_pre_header
    _
  $region3: #{aux_dice_loss.1} parent=0 // loop_header
    %s9 = sphi 0, %s13
    %p10 = scmp.ge.s32.totalorder %s9, 4
    %s16 = sphi 0, %s35
    %s17 = sphi 0, %s31
    %s18 = sphi 0, %s27
    %s19 = sphi 0, %s16
    %s20 = sphi 0, %s17
    %s21 = sphi 0, %s18
    %s22 = sphi 0, %s19
    %s23 = sphi 0, %s20
    %s24 = sphi 0, %s21
    %s46 = sphi 0, %s48
    %s49 = sphi 0, %s46
    %s50 = sphi 0, %s49
    %s66 = sphi 0, %s50
    %s80 = sphi 0, %s82
    %s83 = sphi 0, %s80
    %s84 = sphi 0, %s83
    %s100 = sphi 0, %s84
    %s110 = sphi 0, %s112
    %s113 = sphi 0, %s110
    %s114 = sphi 0, %s113
    %s130 = sphi 0, %s114
    %s138 = sphi 0, %s140
    %s141 = sphi 0, %s138
    %s142 = sphi 0, %s141
    %s158 = sphi 0, %s142
  $region4: #{aux_dice_loss.1} parent=0 // loop_header_branch
    %12 = sbr.rel (%p10) target = $region8
  $region5: #{aux_dice_loss.1} parent=0 // loop_body
    %s14 = ssub.s32 %s9, 1
    %s15 = ssub.s32 %s9, 2
    %s25 = sadd.s32 1, %s18
    %p26 = scmp.ge.s32.totalorder %s25, 1
    %s27 = scalar_select %p26, 0, %s25
    %s28 = sadd.s32 1, %s17
    %s29 = scalar_select %p26, %s28, %s17
    %p30 = scmp.ge.s32.totalorder %s29, 2
    %s31 = scalar_select %p30, 0, %s29
    %s32 = sadd.s32 1, %s16
    %s33 = scalar_select %p30, %s32, %s16
    %p34 = scmp.ge.s32.totalorder %s33, 1
    %s35 = scalar_select %p34, 0, %s33
    %s36 = sadd.s32 %s16, %s18
    %p37 = scmp.lt.s32.totalorder %s36, 0
    %s38 = scalar_select %p37, %s36, 0
    %s39 = sadd.s32 %s35, %s27
    %p40 = scmp.lt.s32.totalorder %s39, 0
    %s41 = scalar_select %p40, %s39, 0
    %s42 = ssub.s32 %s17, %s31
    %s43 = ssub.s32 %s38, %s41
    %s44 = sor.u32 %s42, %s43
    %p45 = scmp.eq.s32.totalorder %s44, 0
    %s47 = sadd.s32 %s46, 1
    %s48 = scalar_select %p45, %s46, %s47
    %p51 = pneg %p45
    %p52 = scmp.eq.s32.totalorder %s9, 1
    %p53 = por %p51, %p52
    %p54 = scmp.ne.s32.totalorder %s46, %s49
    %p55 = scmp.eq.s32.totalorder %s9, 0
    %p56 = por %p54, %p55
    %p57 = scmp.ne.s32.totalorder %s46, %s49
    %p58 = scmp.eq.s32.totalorder %s14, 1
    %p59 = por %p57, %p58
    %p60 = scmp.ne.s32.totalorder %s49, %s50
    %p61 = scmp.eq.s32.totalorder %s14, 0
    %p62 = por %p60, %p61
    %p63 = scmp.ne.s32.totalorder %s49, %s50
    %p64 = scmp.eq.s32.totalorder %s15, 1
    %p65 = por %p63, %p64
    %p67 = scmp.ne.s32.totalorder %s50, %s66
    %p68 = scmp.eq.s32.totalorder %s15, 0
    %p69 = por %p67, %p68
    %s70 = sadd.s32 %s16, %s18
    %p71 = scmp.lt.s32.totalorder %s70, 0
    %s72 = scalar_select %p71, %s70, 0
    %s73 = sadd.s32 %s35, %s27
    %p74 = scmp.lt.s32.totalorder %s73, 0
    %s75 = scalar_select %p74, %s73, 0
    %s76 = ssub.s32 %s17, %s31
    %s77 = ssub.s32 %s72, %s75
    %s78 = sor.u32 %s76, %s77
    %p79 = scmp.eq.s32.totalorder %s78, 0
    %s81 = sadd.s32 %s80, 1
    %s82 = scalar_select %p79, %s80, %s81
    %p85 = pneg %p79
    %p86 = scmp.eq.s32.totalorder %s9, 1
    %p87 = por %p85, %p86
    %p88 = scmp.ne.s32.totalorder %s80, %s83
    %p89 = scmp.eq.s32.totalorder %s9, 0
    %p90 = por %p88, %p89
    %p91 = scmp.ne.s32.totalorder %s80, %s83
    %p92 = scmp.eq.s32.totalorder %s14, 1
    %p93 = por %p91, %p92
    %p94 = scmp.ne.s32.totalorder %s83, %s84
    %p95 = scmp.eq.s32.totalorder %s14, 0
    %p96 = por %p94, %p95
    %p97 = scmp.ne.s32.totalorder %s83, %s84
    %p98 = scmp.eq.s32.totalorder %s15, 1
    %p99 = por %p97, %p98
    %p101 = scmp.ne.s32.totalorder %s84, %s100
    %p102 = scmp.eq.s32.totalorder %s15, 0
    %p103 = por %p101, %p102
    %s104 = sadd.s32 %s16, %s18
    %s105 = sadd.s32 %s35, %s27
    %s106 = ssub.s32 %s17, %s31
    %s107 = ssub.s32 %s104, %s105
    %s108 = sor.u32 %s106, %s107
    %p109 = scmp.eq.s32.totalorder %s108, 0
    %s111 = sadd.s32 %s110, 1
    %s112 = scalar_select %p109, %s110, %s111
    %p115 = pneg %p109
    %p116 = scmp.eq.s32.totalorder %s9, 1
    %p117 = por %p115, %p116
    %p118 = scmp.ne.s32.totalorder %s110, %s113
    %p119 = scmp.eq.s32.totalorder %s9, 0
    %p120 = por %p118, %p119
    %p121 = scmp.ne.s32.totalorder %s110, %s113
    %p122 = scmp.eq.s32.totalorder %s14, 1
    %p123 = por %p121, %p122
    %p124 = scmp.ne.s32.totalorder %s113, %s114
    %p125 = scmp.eq.s32.totalorder %s14, 0
    %p126 = por %p124, %p125
    %p127 = scmp.ne.s32.totalorder %s113, %s114
    %p128 = scmp.eq.s32.totalorder %s15, 1
    %p129 = por %p127, %p128
    %p131 = scmp.ne.s32.totalorder %s114, %s130
    %p132 = scmp.eq.s32.totalorder %s15, 0
    %p133 = por %p131, %p132
    %s134 = ssub.s32 %s16, %s35
    %s135 = ssub.s32 %s17, %s31
    %s136 = sor.u32 %s134, %s135
    %p137 = scmp.eq.s32.totalorder %s136, 0
    %s139 = sadd.s32 %s138, 1
    %s140 = scalar_select %p137, %s138, %s139
    %p143 = pneg %p137
    %p144 = scmp.eq.s32.totalorder %s9, 1
    %p145 = por %p143, %p144
    %p146 = scmp.ne.s32.totalorder %s138, %s141
    %p147 = scmp.eq.s32.totalorder %s9, 0
    %p148 = por %p146, %p147
    %p149 = scmp.ne.s32.totalorder %s138, %s141
    %p150 = scmp.eq.s32.totalorder %s14, 1
    %p151 = por %p149, %p150
    %p152 = scmp.ne.s32.totalorder %s141, %s142
    %p153 = scmp.eq.s32.totalorder %s14, 0
    %p154 = por %p152, %p153
    %p155 = scmp.ne.s32.totalorder %s141, %s142
    %p156 = scmp.eq.s32.totalorder %s15, 1
    %p157 = por %p155, %p156
    %p159 = scmp.ne.s32.totalorder %s142, %s158
    %p160 = scmp.eq.s32.totalorder %s15, 0
    %p161 = por %p159, %p160
    %p162 = scmp.le.s32.totalorder 1, %s9
    %p163 = scmp.lt.s32.totalorder %s9, 3
    %p164 = pnand %p162, %p163
    %p165 = pneg %p164
    // Predicated region
    $region9: #{aux_dice_loss.1} parent=5 // pred_check
      _
    $region10: #{aux_dice_loss.1} parent=5 // pred_check_branch
      %167 = sbr.rel (%p164) target = $region12
    $region11: #{aux_dice_loss.1} parent=5 // pred_region
      %s168 = ssub.s32 %s9, 1
    $region12: #{aux_dice_loss.1} parent=5 // pred_fallthru
      _
    %p169 = scmp.lt.s32.totalorder %s9, 2
    // Predicated region
    $region13: #{aux_dice_loss.1} parent=5 // pred_check
      %p170 = pneg %p169
    $region14: #{aux_dice_loss.1} parent=5 // pred_check_branch
      %172 = sbr.rel (%p170) target = $region16
    $region15: #{aux_dice_loss.1} parent=5 // pred_region
      // Predicated region
      $region17: #{aux_dice_loss.1} parent=15 // pred_check
        %p173 = pneg %p56
      $region18: #{aux_dice_loss.1} parent=15 // pred_check_branch
        %175 = sbr.rel (%p173) target = $region20
      $region19: #{aux_dice_loss.1} parent=15 // pred_region
        %s176 = sadd.s32 %s16, %s18
        %p177 = scmp.lt.s32.totalorder %s176, 0
        %s178 = scalar_select %p177, %s176, 0
        %s179 = smul.u32 2, %s178
        %p180 = scmp.lt.s32.totalorder %s17, 1
        %s181 = scalar_select %p180, %s17, 1
        %p182 = scmp.lt.s32.totalorder %s179, 1
        %s183 = scalar_select %p182, %s179, 1
        %s184 = smul.addr %s181, 2
        %s185 = sadd.s32 %s183, %s184
        %s186 = smul.addr %s185, 4
        %s187 = scalar_lea.vmem %s0, %s186
        %s188 = sadd.s32 %s16, %s18
        %p189 = scmp.lt.s32.totalorder %s188, 0
        %s190 = scalar_select %p189, %s188, 0
        %s191 = smul.u32 2, %s190
      $region20: #{aux_dice_loss.1} parent=15 // pred_fallthru
        _
      // Predicated region
      $region21: #{aux_dice_loss.1} parent=15 // pred_check
        %p192 = pneg %p90
      $region22: #{aux_dice_loss.1} parent=15 // pred_check_branch
        %194 = sbr.rel (%p192) target = $region24
      $region23: #{aux_dice_loss.1} parent=15 // pred_region
        %s195 = sadd.s32 %s16, %s18
        %p196 = scmp.lt.s32.totalorder %s195, 0
        %s197 = scalar_select %p196, %s195, 0
        %s198 = smul.u32 2, %s197
        %p199 = scmp.lt.s32.totalorder %s17, 1
        %s200 = scalar_select %p199, %s17, 1
        %p201 = scmp.lt.s32.totalorder %s198, 1
        %s202 = scalar_select %p201, %s198, 1
        %s203 = smul.addr %s200, 2
        %s204 = sadd.s32 %s202, %s203
        %s205 = smul.addr %s204, 4
        %s206 = scalar_lea.vmem %s1, %s205
        %s207 = sadd.s32 %s16, %s18
        %p208 = scmp.lt.s32.totalorder %s207, 0
        %s209 = scalar_select %p208, %s207, 0
        %s210 = smul.u32 2, %s209
      $region24: #{aux_dice_loss.1} parent=15 // pred_fallthru
        _
      // Predicated region
      $region25: #{aux_dice_loss.1} parent=15 // pred_check
        %p211 = pneg %p120
      $region26: #{aux_dice_loss.1} parent=15 // pred_check_branch
        %213 = sbr.rel (%p211) target = $region28
      $region27: #{aux_dice_loss.1} parent=15 // pred_region
        %s214 = sadd.s32 %s16, %s18
        %s215 = smul.u32 2, %s214
        %p216 = scmp.lt.s32.totalorder %s17, 1
        %s217 = scalar_select %p216, %s17, 1
        %p218 = scmp.lt.s32.totalorder %s215, 1
        %s219 = scalar_select %p218, %s215, 1
        %s220 = smul.addr %s217, 2
        %s221 = sadd.s32 %s219, %s220
        %s222 = scalar_lea.vmem %s2, %s221
        %s223 = sadd.s32 %s16, %s18
        %s224 = smul.u32 2, %s223
      $region28: #{aux_dice_loss.1} parent=15 // pred_fallthru
        _
    $region16: #{aux_dice_loss.1} parent=5 // pred_fallthru
      _
    %p225 = scmp.le.s32.totalorder 1, %s9
    %p226 = scmp.lt.s32.totalorder %s9, 3
    %p227 = pnand %p225, %p226
    %p228 = pneg %p227
    // Predicated region
    $region29: #{aux_dice_loss.1} parent=5 // pred_check
      _
    $region30: #{aux_dice_loss.1} parent=5 // pred_check_branch
      %230 = sbr.rel (%p227) target = $region32
    $region31: #{aux_dice_loss.1} parent=5 // pred_region
      %s231 = ssub.s32 %s9, 1
      %s232 = sadd.s32 %s19, %s21
      %p233 = scmp.lt.s32.totalorder %s232, 0
      %s234 = scalar_select %p233, %s232, 0
      %s235 = smul.u32 2, %s234
      %p236 = scmp.lt.s32.totalorder %s20, 1
      %s237 = scalar_select %p236, %s20, 1
      %p238 = scmp.lt.s32.totalorder %s235, 1
      %s239 = scalar_select %p238, %s235, 1
      %s240 = smul.addr %s237, 2
      %s241 = sadd.s32 %s239, %s240
      %s242 = smul.addr %s241, 4
      %s243 = scalar_lea.vmem %s0, %s242
      %p244 = pneg %p62
      %p245 = pneg %p59
      %s246 = sadd.s32 %s19, %s21
      %p247 = scmp.lt.s32.totalorder %s246, 0
      %s248 = scalar_select %p247, %s246, 0
      %s249 = smul.u32 2, %s248
      %p250 = scmp.lt.s32.totalorder %s20, 1
      %s251 = scalar_select %p250, %s20, 1
      %p252 = scmp.lt.s32.totalorder %s249, 1
      %s253 = scalar_select %p252, %s249, 1
      %s254 = smul.addr %s251, 2
      %s255 = sadd.s32 %s253, %s254
      %s256 = smul.addr %s255, 4
      %s257 = scalar_lea.vmem %s1, %s256
      %p258 = pneg %p96
      %p259 = pneg %p93
      %s260 = sadd.s32 %s19, %s21
      %s261 = smul.u32 2, %s260
      %p262 = scmp.lt.s32.totalorder %s20, 1
      %s263 = scalar_select %p262, %s20, 1
      %p264 = scmp.lt.s32.totalorder %s261, 1
      %s265 = scalar_select %p264, %s261, 1
      %s266 = smul.addr %s263, 2
      %s267 = sadd.s32 %s265, %s266
      %s268 = scalar_lea.vmem %s2, %s267
      %p269 = pneg %p126
      %p270 = pneg %p123
      %p271 = pneg %p154
      %p272 = pneg %p151
      %p273 = scmp.lt.s32.totalorder %s19, 0
      %s274 = scalar_select %p273, %s19, 0
      %p275 = scmp.lt.s32.totalorder %s20, 1
      %s276 = scalar_select %p275, %s20, 1
      %s277 = smul.addr %s274, 2
      %s278 = sadd.s32 %s276, %s277
      %s279 = smul.addr %s278, 4
      %s280 = scalar_lea.vmem %s3, %s279
      %s281 = sadd.s32 %s19, %s21
      %p282 = scmp.lt.s32.totalorder %s281, 0
      %s283 = scalar_select %p282, %s281, 0
      %s284 = smul.u32 2, %s283
      %p285 = scmp.lt.s32.totalorder %s20, 1
      %s286 = scalar_select %p285, %s20, 1
      %p287 = scmp.lt.s32.totalorder %s284, 1
      %s288 = scalar_select %p287, %s284, 1
      %s289 = smul.addr %s286, 2
      %s290 = sadd.s32 %s288, %s289
      %s291 = smul.addr %s290, 4
      %s292 = scalar_lea.vmem %s0, %s291
      %s293 = sadd.s32 %s19, %s21
      %p294 = scmp.lt.s32.totalorder %s293, 0
      %s295 = scalar_select %p294, %s293, 0
      %s296 = smul.u32 2, %s295
      %s297 = sadd.s32 %s19, %s21
      %p298 = scmp.lt.s32.totalorder %s297, 0
      %s299 = scalar_select %p298, %s297, 0
      %s300 = smul.u32 2, %s299
      %p301 = scmp.lt.s32.totalorder %s20, 1
      %s302 = scalar_select %p301, %s20, 1
      %p303 = scmp.lt.s32.totalorder %s300, 1
      %s304 = scalar_select %p303, %s300, 1
      %s305 = smul.addr %s302, 2
      %s306 = sadd.s32 %s304, %s305
      %s307 = smul.addr %s306, 4
      %s308 = scalar_lea.vmem %s1, %s307
      %s309 = sadd.s32 %s19, %s21
      %p310 = scmp.lt.s32.totalorder %s309, 0
      %s311 = scalar_select %p310, %s309, 0
      %s312 = smul.u32 2, %s311
      %s313 = sadd.s32 %s19, %s21
      %s314 = smul.u32 2, %s313
      %p315 = scmp.lt.s32.totalorder %s20, 1
      %s316 = scalar_select %p315, %s20, 1
      %p317 = scmp.lt.s32.totalorder %s314, 1
      %s318 = scalar_select %p317, %s314, 1
      %s319 = smul.addr %s316, 2
      %s320 = sadd.s32 %s318, %s319
      %s321 = scalar_lea.vmem %s2, %s320
      %s322 = sadd.s32 %s19, %s21
      %s323 = smul.u32 2, %s322
      %p324 = scmp.lt.s32.totalorder %s19, 0
      %s325 = scalar_select %p324, %s19, 0
      %p326 = scmp.lt.s32.totalorder %s20, 1
      %s327 = scalar_select %p326, %s20, 1
      %s328 = smul.addr %s325, 2
      %s329 = sadd.s32 %s327, %s328
      %s330 = smul.addr %s329, 4
      %s331 = scalar_lea.vmem %s3, %s330
      %p332 = scmp.eq.s32.totalorder %s21, 0
      // Predicated region
      $region33: #{aux_dice_loss.1} parent=31 // pred_check
        %p333 = pneg %p332
      $region34: #{aux_dice_loss.1} parent=31 // pred_check_branch
        %335 = sbr.rel (%p333) target = $region36
      $region35: #{aux_dice_loss.1} parent=31 // pred_region
        %vm336 = vcmask 35840
        %337 = vst.msk [vmem:[%s331] sm:$0xf] %vm336, 0.0
      $region36: #{aux_dice_loss.1} parent=31 // pred_fallthru
        _
      %v338 = vld [vmem:[%s321] sm:$0x3]
      %vm339 = vcmp.ge.s32.totalorder %v338, 0
      %v340 = vsel %vm339, 1, 0
      %v341 = vcvt.s32.f32 %v340
      %v342 = vlaneseq
      %v343 = vshrl.u32 %v342, 7
      %v344 = vlaneseq
      %v345 = vshrl.u32 %v344, 7
      %v346 = vsub.s32 0, %v345
      %v347 = vrot.slane %v338, %v346
      %v348 = vlaneseq
      %v349 = vshrl.u32 %v348, 7
      %v350 = vsub.s32 1, %v349
      %v351 = vrot.slane %v338, %v350
      %vm352 = vcmp.eq.s32.totalorder %v347, %v343
      %vm353 = vcmp.eq.s32.totalorder %v351, %v343
      %v354 = vsel %vm352, 1, 0
      %v355 = vsel %vm353, 1, 0
      %v356 = vcvt.s32.f32 %v354
      %v357 = vcvt.s32.f32 %v355
      %v358 = vld [vmem:[%s292] sm:$0xff]
      %v359 = vlaneseq
      %v360 = vshrl.u32 %v359, 7
      %v361 = vsub.s32 0, %v360
      %v362 = vrot.slane %v340, %v361
      %v363 = vlaneseq
      %v364 = vshrl.u32 %v363, 7
      %v365 = vsub.s32 1, %v364
      %v366 = vrot.slane %v340, %v365
      %vm367 = vcmp.eq.s32.totalorder %v362, 1
      %vm368 = vcmp.eq.s32.totalorder %v366, 1
      %v370 = vcombine.high %v358, %v358
      %v372 = vsel %vm367, %v358, 0.0
      %v373 = vsel %vm368, %v370, 0.0
      %vm374 = vcmask 1043456
      %v375 = vsel %vm374, %v372, -inf
      %v376 = vrot.slane %v375, 4
      %v377 = vmax.f32 %v375, %v376
      %v378 = vrot.slane %v377, 2
      %v379 = vmax.f32 %v377, %v378
      %v380 = vrot.slane %v379, 1
      %v381 = vmax.f32 %v379, %v380
      %v382 = vsel %vm374, %v373, -inf
      %v383 = vrot.slane %v382, 4
      %v384 = vmax.f32 %v382, %v383
      %v385 = vrot.slane %v384, 2
      %v386 = vmax.f32 %v384, %v385
      %v387 = vrot.slane %v386, 1
      %v388 = vmax.f32 %v386, %v387
      %v389 = vsub.f32 %v372, %v381
      %v390 = vsub.f32 %v373, %v388
      %v391 = vmul.f32 %v389, 1.442695
      %v392 = vpow.pop %v391
      %v393 = vmul.f32 %v390, 1.442695
      %v394 = vpow.pop %v393
      %v395 = vsel %vm374, %v392, 0.0
      %v396 = vrot.slane %v395, 4
      %v397 = vadd.f32 %v395, %v396
      %v398 = vrot.slane %v397, 2
      %v399 = vadd.f32 %v397, %v398
      %v400 = vrot.slane %v399, 1
      %v401 = vadd.f32 %v399, %v400
      %v402 = vsel %vm374, %v394, 0.0
      %v403 = vrot.slane %v402, 4
      %v404 = vadd.f32 %v402, %v403
      %v405 = vrot.slane %v404, 2
      %v406 = vadd.f32 %v404, %v405
      %v407 = vrot.slane %v406, 1
      %v408 = vadd.f32 %v406, %v407
      %v409 = vrcp.pop %v401
      %v410 = vrcp.pop %v408
      %v412 = vlaneseq
      %v413 = vshrl.u32 %v412, 7
      %v414 = vsub.s32 0, %v413
      %v415 = vrot.slane %v341, %v414
      %v416 = vlaneseq
      %v417 = vshrl.u32 %v416, 7
      %v418 = vsub.s32 1, %v417
      %v419 = vrot.slane %v341, %v418
      %v422 = vmul.f32 %v409, %v415
      %v423 = vmul.f32 %v410, %v419
      %v424 = vlaneseq
      %v425 = vshrl.u32 %v424, 7
      %v426 = vsub.s32 0, %v425
      %v427 = vrot.slane %v422, %v426
      %v428 = vlaneseq
      %v429 = vshrl.u32 %v428, 7
      %v430 = vsub.s32 0, %v429
      %v431 = vrot.slane %v423, %v430
      %v432 = vmul.f32 %v392, %v427
      %v433 = vmul.f32 %v394, %v431
      %v434 = vld [vmem:[%s308] sm:$0xff]
      %v436 = vcombine.high %v434, %v434
      %v438 = vsel %vm367, %v434, 0.0
      %v439 = vsel %vm368, %v436, 0.0
      %v440 = vsel %vm374, %v438, -inf
      %v441 = vrot.slane %v440, 4
      %v442 = vmax.f32 %v440, %v441
      %v443 = vrot.slane %v442, 2
      %v444 = vmax.f32 %v442, %v443
      %v445 = vrot.slane %v444, 1
      %v446 = vmax.f32 %v444, %v445
      %v447 = vsel %vm374, %v439, -inf
      %v448 = vrot.slane %v447, 4
      %v449 = vmax.f32 %v447, %v448
      %v450 = vrot.slane %v449, 2
      %v451 = vmax.f32 %v449, %v450
      %v452 = vrot.slane %v451, 1
      %v453 = vmax.f32 %v451, %v452
      %v454 = vsub.f32 %v438, %v446
      %v455 = vsub.f32 %v439, %v453
      %v456 = vmul.f32 %v454, 1.442695
      %v457 = vpow.pop %v456
      %v458 = vmul.f32 %v455, 1.442695
      %v459 = vpow.pop %v458
      %v460 = vsel %vm374, %v457, 0.0
      %v461 = vrot.slane %v460, 4
      %v462 = vadd.f32 %v460, %v461
      %v463 = vrot.slane %v462, 2
      %v464 = vadd.f32 %v462, %v463
      %v465 = vrot.slane %v464, 1
      %v466 = vadd.f32 %v464, %v465
      %v467 = vsel %vm374, %v459, 0.0
      %v468 = vrot.slane %v467, 4
      %v469 = vadd.f32 %v467, %v468
      %v470 = vrot.slane %v469, 2
      %v471 = vadd.f32 %v469, %v470
      %v472 = vrot.slane %v471, 1
      %v473 = vadd.f32 %v471, %v472
      %v474 = vrcp.pop %v466
      %v475 = vrcp.pop %v473
      %v476 = vmul.f32 %v474, %v415
      %v477 = vmul.f32 %v475, %v419
      %v478 = vlaneseq
      %v479 = vshrl.u32 %v478, 7
      %v480 = vsub.s32 0, %v479
      %v481 = vrot.slane %v476, %v480
      %v482 = vlaneseq
      %v483 = vshrl.u32 %v482, 7
      %v484 = vsub.s32 0, %v483
      %v485 = vrot.slane %v477, %v484
      %v486 = vmul.f32 %v457, %v481
      %v487 = vmul.f32 %v459, %v485
      %v488 = vmul.f32 %v432, %v356
      %v489 = vmul.f32 %v433, %v357
      %v490 = vsel %vm374, %v488, 0.0
      %v491 = vsel %vm374, %v489, 0.0
      %v492 = vadd.f32 %v490, %v491
      %493 = vadd.xlane.f32.xlu0 %v492
      %v494 = vpop.xlane.xlu0 %493
      %v495 = vsel %vm374, %v432, 0.0
      %v496 = vsel %vm374, %v433, 0.0
      %v497 = vadd.f32 %v495, %v496
      %498 = vadd.xlane.f32.xlu0 %v497
      %v499 = vpop.xlane.xlu0 %498
      %v500 = vmul.f32 %v486, %v356
      %v501 = vmul.f32 %v487, %v357
      %v502 = vsel %vm374, %v500, 0.0
      %v503 = vsel %vm374, %v501, 0.0
      %v504 = vadd.f32 %v502, %v503
      %505 = vadd.xlane.f32.xlu0 %v504
      %v506 = vpop.xlane.xlu0 %505
      %v507 = vsel %vm374, %v486, 0.0
      %v508 = vsel %vm374, %v487, 0.0
      %v509 = vadd.f32 %v507, %v508
      %510 = vadd.xlane.f32.xlu0 %v509
      %v511 = vpop.xlane.xlu0 %510
      %v512 = vsel %vm374, %v356, 0.0
      %v513 = vsel %vm374, %v357, 0.0
      %v514 = vadd.f32 %v512, %v513
      %515 = vadd.xlane.f32.xlu0 %v514
      %v516 = vpop.xlane.xlu0 %515
      %vm517 = vcmask 7168
      %v518 = vsel %vm517, %v494, %v499
      %vm519 = vcmask 15360
      %v520 = vsel %vm519, %v518, %v506
      %vm521 = vcmask 23552
      %v522 = vsel %vm521, %v520, %v511
      %vm523 = vcmask 31744
      %v524 = vsel %vm523, %v522, %v516
      %v525 = vld [vmem:[%s331] sm:$0xf]
      %v526 = vadd.f32 %v525, %v524
      %vm527 = vcmask 35840
      %528 = vst.msk [vmem:[%s331] sm:$0xf] %vm527, %v526
      %p529 = scmp.lt.s32.totalorder %s19, 0
      %s530 = scalar_select %p529, %s19, 0
      %p531 = scmp.lt.s32.totalorder %s20, 1
      %s532 = scalar_select %p531, %s20, 1
      %s533 = smul.addr %s530, 2
      %s534 = sadd.s32 %s532, %s533
      %s535 = smul.addr %s534, 4
      %s536 = scalar_lea.vmem %s3, %s535
      // Predicated region
      $region37: #{aux_dice_loss.1} parent=31 // pred_check
        %p537 = pneg %p151
      $region38: #{aux_dice_loss.1} parent=31 // pred_check_branch
        %539 = sbr.rel (%p537) target = $region40
      $region39: #{aux_dice_loss.1} parent=31 // pred_region
        _
      $region40: #{aux_dice_loss.1} parent=31 // pred_fallthru
        _
    $region32: #{aux_dice_loss.1} parent=5 // pred_fallthru
      _
    %p540 = scmp.le.s32.totalorder 2, %s9
    // Predicated region
    $region41: #{aux_dice_loss.1} parent=5 // pred_check
      %p541 = pneg %p540
    $region42: #{aux_dice_loss.1} parent=5 // pred_check_branch
      %543 = sbr.rel (%p541) target = $region44
    $region43: #{aux_dice_loss.1} parent=5 // pred_region
      %s544 = ssub.s32 %s9, 2
      // Predicated region
      $region45: #{aux_dice_loss.1} parent=43 // pred_check
        %p545 = pneg %p157
      $region46: #{aux_dice_loss.1} parent=43 // pred_check_branch
        %547 = sbr.rel (%p545) target = $region48
      $region47: #{aux_dice_loss.1} parent=43 // pred_region
        %p548 = scmp.lt.s32.totalorder %s22, 0
        %s549 = scalar_select %p548, %s22, 0
        %p550 = scmp.lt.s32.totalorder %s23, 1
        %s551 = scalar_select %p550, %s23, 1
        %s552 = smul.addr %s549, 2
        %s553 = sadd.s32 %s551, %s552
        %s554 = smul.addr %s553, 4
        %s555 = scalar_lea.vmem %s3, %s554
      $region48: #{aux_dice_loss.1} parent=43 // pred_fallthru
        _
    $region44: #{aux_dice_loss.1} parent=5 // pred_fallthru
      _
  $region6: #{aux_dice_loss.1} parent=0 // loop_footer
    %s13 = sadd.s32 1, %s9
  $region7: #{aux_dice_loss.1} parent=0 // loop_footer_branch
    %8 = sbr.rel target = $region3
  $region8: #{aux_dice_loss.1} parent=0 // loop_exit
    _

</llo_original>
